<compile_context>
chip_gen: v7x
topology: tpu7x:2x2x1
jax: 0.10.0
libtpu: 0.0.40
codegen_flags: <defaults>
</compile_context>

<pallas_src>
import functools

import jax
import jax.numpy as jnp
from jax.experimental import pallas as pl
from jax.experimental.pallas import tpu as pltpu


def _round_up(v, m):
    return ((v + m - 1) // m) * m


def _round_down(v, m):
    return (v // m) * m


# ---------------------------------------------------------------------------
# Kernels
# ---------------------------------------------------------------------------
def _logreg_single_kernel(x_ref, w_ref, b_ref, o_ref):
    # Whole problem in one VMEM block (toy / tiny batches).
    xf = x_ref[...].astype(jnp.float32)
    z = jnp.sum(xf * w_ref[...], axis=-1, keepdims=True) + b_ref[0, 0]
    o_ref[...] = jax.nn.sigmoid(z).astype(o_ref.dtype)


def _logreg_tiled_kernel(x_ref, w_ref, b_ref, o_ref, *, f_total, tk, needs_mask):
    # grid = (batch blocks ["parallel"], feature blocks ["arbitrary" reduction])
    # x_ref: (TB, TK) native dtype   w_ref: (1, TK) f32   b_ref: (1,1) SMEM
    # o_ref: (TB, 1) f32 -- resident across the feature axis, used as the
    # accumulator (f32 output dtype, so no separate scratch needed).
    k = pl.program_id(1)

    @pl.when(k == 0)
    def _():
        o_ref[...] = jnp.zeros_like(o_ref)

    xf = x_ref[...].astype(jnp.float32)       # VPU upcast (v5e has no bf16 VALU)
    prod = xf * w_ref[...]
    if needs_mask:
        # Last feature chunk reads past F; zero the out-of-range lanes.
        lane = jax.lax.broadcasted_iota(jnp.int32, prod.shape, 1)
        prod = jnp.where(lane < (f_total - k * tk), prod, 0.0)
    o_ref[...] += jnp.sum(prod, axis=-1, keepdims=True)

    @pl.when(k == pl.num_programs(1) - 1)
    def _():
        o_ref[...] = jax.nn.sigmoid(o_ref[...] + b_ref[0, 0]).astype(o_ref.dtype)


# ---------------------------------------------------------------------------
# Sizing
# ---------------------------------------------------------------------------
# Keep the single-block fast path small so multi-MiB problems get a multi-step
# "parallel" grid (both v7x TensorCores).
_SINGLE_BLOCK_MAX_BYTES = 1 << 20


def _vmem_limit_bytes():
    cap = None
    try:
        info = pltpu.get_tpu_info()
        for name in ("vmem_capacity_bytes", "vmem_size_bytes", "vmem_bytes"):
            cap = getattr(info, name, None)
            if cap:
                break
    except Exception:
        cap = None
    if not cap:
        cap = 64 << 20  # conservative fallback: v7x per-TensorCore VMEM
    # v5e/v6e (128 MiB physical) -> 64 MiB scoped; v7x (64 MiB) -> 48 MiB.
    return int(min(64 << 20, (3 * int(cap)) // 4))


def _choose_tiles(B, F, x_itemsize, vmem_limit):
    """Pick (block_rows, block_cols) so the resident working set
    (2x double-buffered x tile + lane-padded double-buffered (TB,1) output
    + possible f32 mul-reduce temp + weight) stays under ~3/4 of the limit."""
    target = (vmem_limit * 3) // 4
    out_row = 2 * 128 * 4  # (TB,1) f32 output block pads to 128 lanes, 2 buffers

    def per_row(tk):
        tk_eff = max(128, _round_up(tk, 128))               # lane padding
        return tk_eff * (2 * x_itemsize + 4) + out_row       # 2x x buf + f32 temp

    # Prefer a full-F tile (single reduction step) if it still gives decent rows.
    tb_full = _round_down(target // per_row(F), 8)
    if tb_full >= min(256, _round_up(B, 8)):
        tb, tk = tb_full, F
    else:
        # Feature axis too wide: split it along the "arbitrary" reduction axis.
        tb = min(512, max(8, _round_up(B, 8)))
        tk_budget = max(0, target // tb - out_row)
        tk = max(128, _round_down(tk_budget // (2 * x_itemsize + 4), 128))
        tk = min(tk, _round_up(F, 128))
    tb = min(tb, _round_up(B, 8))
    if B >= 16:
        # At least 2 batch blocks so the "parallel" axis can use both v7x cores.
        tb = min(tb, _round_up((B + 1) // 2, 8))
    return max(8, tb), tk


# ---------------------------------------------------------------------------
# Wrapper
# ---------------------------------------------------------------------------
def logistic_regression_forward(x, weight, bias, *, block_rows=None, block_cols=None):
    """x: (B, F) (f32/bf16/...), weight: (1, F), bias: (1,) -> (B, 1) f32.

    Equivalent to torch: sigmoid(Linear(n_features, 1)(x)).
    """
    B, F = x.shape
    w_row = weight.reshape(1, F).astype(jnp.float32)   # lane-dense weight row
    b2 = bias.reshape(1, 1).astype(jnp.float32)        # scalar bias -> SMEM
    x_itemsize = jnp.dtype(x.dtype).itemsize

    vmem_limit = _vmem_limit_bytes()
    cost = pl.CostEstimate(
        flops=2 * B * F,
        transcendentals=B,
        bytes_accessed=B * F * x_itemsize + 4 * (F + 1 + B),
    )

    auto = block_rows is None and block_cols is None
    padded_x_bytes = _round_up(B, 8) * _round_up(F, 128) * x_itemsize
    if auto and padded_x_bytes <= _SINGLE_BLOCK_MAX_BYTES:
        # Whole problem in one VMEM block — cheapest for toy/small batches.
        return pl.pallas_call(
            _logreg_single_kernel,
            out_shape=jax.ShapeDtypeStruct((B, 1), jnp.float32),
            in_specs=[
                pl.BlockSpec(memory_space=pltpu.VMEM),   # x
                pl.BlockSpec(memory_space=pltpu.VMEM),   # w (1, F)
                pl.BlockSpec(memory_space=pltpu.SMEM),   # bias scalar
            ],
            out_specs=pl.BlockSpec(memory_space=pltpu.VMEM),
            compiler_params=pltpu.CompilerParams(vmem_limit_bytes=vmem_limit),
            cost_estimate=cost,
        )(x, w_row, b2)

    # ---- Batch-tiled + feature-split, auto-pipelined path ----
    tb, tk = _choose_tiles(B, F, x_itemsize, vmem_limit)
    if block_rows is not None:
        tb = max(8, _round_up(min(block_rows, B), 8))
    if block_cols is not None:
        tk = F if block_cols >= F else max(128, _round_down(block_cols, 128))

    grid = (pl.cdiv(B, tb), pl.cdiv(F, tk))
    needs_mask = (tk < F) and (F % tk != 0)

    kernel = functools.partial(
        _logreg_tiled_kernel, f_total=F, tk=tk, needs_mask=needs_mask)

    return pl.pallas_call(
        kernel,
        out_shape=jax.ShapeDtypeStruct((B, 1), jnp.float32),
        grid=grid,
        in_specs=[
            pl.BlockSpec((tb, tk), lambda i, k: (i, k)),                         # x tile
            pl.BlockSpec((1, tk), lambda i, k: (0, k)),                          # weight chunk
            pl.BlockSpec((1, 1), lambda i, k: (0, 0), memory_space=pltpu.SMEM),  # bias
        ],
        out_specs=pl.BlockSpec((tb, 1), lambda i, k: (i, 0)),                    # resident over k
        compiler_params=pltpu.CompilerParams(
            dimension_semantics=("parallel", "arbitrary"),
            vmem_limit_bytes=vmem_limit),
        cost_estimate=cost,
    )(x, w_row, b2)


if __name__ == "__main__":
    key = jax.random.PRNGKey(0)
    kx, kw, kb, kx2, kx3 = jax.random.split(key, 5)

    # --- Toy shape consistent with the module (single-block fast path) ---
    batch, n_features = 8, 32
    bound = 1.0 / (n_features ** 0.5)
    weight = jax.random.uniform(kw, (1, n_features), jnp.float32, -bound, bound)
    bias = jax.random.uniform(kb, (1,), jnp.float32, -bound, bound)
    x = jax.random.normal(kx, (batch, n_features), jnp.float32)

    y = jax.block_until_ready(logistic_regression_forward(x, weight, bias))
    y_ref = jax.nn.sigmoid(x @ weight.T + bias)
    assert y.shape == (batch, 1)
    assert jnp.allclose(y, y_ref, atol=1e-5, rtol=1e-5), "mismatch (single-block)"

    # --- Tiled path with forced small blocks: uneven batch tail AND masked
    #     feature tail (F=200 with 128-wide feature chunks) ---
    B2, F2 = 300, 200
    bound2 = 1.0 / (F2 ** 0.5)
    kw2, kb2 = jax.random.split(kb)
    w2 = jax.random.uniform(kw2, (1, F2), jnp.float32, -bound2, bound2)
    b2 = jax.random.uniform(kb2, (1,), jnp.float32, -bound2, bound2)
    x2 = jax.random.normal(kx2, (B2, F2), jnp.float32)

    y2 = jax.block_until_ready(
        logistic_regression_forward(x2, w2, b2, block_rows=128, block_cols=128))
    y2_ref = jax.nn.sigmoid(x2 @ w2.T + b2)
    assert y2.shape == (B2, 1)
    assert jnp.allclose(y2, y2_ref, atol=1e-5, rtol=1e-5), "mismatch (tiled f32)"

    # --- bf16 input: in-kernel upcast, no wrapper-side f32 copy of x ---
    x2b = x2.astype(jnp.bfloat16)
    y2b = jax.block_until_ready(
        logistic_regression_forward(x2b, w2, b2, block_rows=128, block_cols=128))
    y2b_ref = jax.nn.sigmoid(x2b.astype(jnp.float32) @ w2.T + b2)
    assert jnp.allclose(y2b, y2b_ref, atol=2e-5, rtol=2e-5), "mismatch (tiled bf16)"

    # --- Auto-sized tiled path (>1 MiB -> multi-block "parallel" grid) ---
    B3, F3 = 2048, 256
    bound3 = 1.0 / (F3 ** 0.5)
    kw3, kb3 = jax.random.split(kb2)
    w3 = jax.random.uniform(kw3, (1, F3), jnp.float32, -bound3, bound3)
    b3 = jax.random.uniform(kb3, (1,), jnp.float32, -bound3, bound3)
    x3 = jax.random.normal(kx3, (B3, F3), jnp.float32)

    y3 = jax.block_until_ready(logistic_regression_forward(x3, w3, b3))
    y3_ref = jax.nn.sigmoid(x3 @ w3.T + b3)
    assert y3.shape == (B3, 1)
    assert jnp.allclose(y3, y3_ref, atol=1e-5, rtol=1e-5), "mismatch (auto tiled)"

    print("KERNEL_OK")
</pallas_src>

<mosaic_0001>
module attributes {stable_mosaic.version = 11 : i64} {
  func.func @_logreg_single_kernel(%arg0: memref<8x32xf32, #tpu.memory_space<vmem>>, %arg1: memref<1x32xf32, #tpu.memory_space<vmem>>, %arg2: memref<1x1xf32, #tpu.memory_space<smem>>, %arg3: memref<8x1xf32, #tpu.memory_space<vmem>>) attributes {dimension_semantics = [], scalar_prefetch = 0 : i64, scratch_operands = 0 : i64, tpu.core_type = #tpu.core_type<tc>} {
    %c0 = arith.constant 0 : index
    %c0_0 = arith.constant 0 : index
    %0 = vector.load %arg0[%c0, %c0_0] : memref<8x32xf32, #tpu.memory_space<vmem>>, vector<8x32xf32>
    %c0_1 = arith.constant 0 : index
    %c0_2 = arith.constant 0 : index
    %1 = vector.load %arg1[%c0_1, %c0_2] : memref<1x32xf32, #tpu.memory_space<vmem>>, vector<1x32xf32>
    %2 = vector.broadcast %1 : vector<1x32xf32> to vector<8x32xf32>
    %3 = arith.mulf %0, %2 : vector<8x32xf32>
    %cst = arith.constant dense<0.000000e+00> : vector<8xf32>
    %4 = vector.multi_reduction <add>, %3, %cst [1] : vector<8x32xf32> to vector<8xf32>
    %5 = vector.shape_cast %4 : vector<8xf32> to vector<8x1xf32>
    %c0_3 = arith.constant 0 : index
    %c0_4 = arith.constant 0 : index
    %6 = memref.load %arg2[%c0_3, %c0_4] : memref<1x1xf32, #tpu.memory_space<smem>>
    %7 = vector.broadcast %6 : f32 to vector<8x1xf32>
    %8 = arith.addf %5, %7 : vector<8x1xf32>
    %9 = arith.negf %8 : vector<8x1xf32>
    %10 = math.exp %9 : vector<8x1xf32>
    %cst_5 = arith.constant 1.000000e+00 : f32
    %11 = vector.broadcast %cst_5 : f32 to vector<8x1xf32>
    %12 = arith.addf %11, %10 : vector<8x1xf32>
    %13 = arith.divf %11, %12 : vector<8x1xf32>
    %c0_6 = arith.constant 0 : index
    %c0_7 = arith.constant 0 : index
    %14 = vector.load %arg3[%c0_6, %c0_7] : memref<8x1xf32, #tpu.memory_space<vmem>>, vector<8x1xf32>
    tpu.vector_store %arg3[%c0_6, %c0_7], %13 {strides = array<i32>} : memref<8x1xf32, #tpu.memory_space<vmem>>, vector<8x1xf32>,
    return
  }
}

</mosaic_0001>

<llo_original>
// kernel: tpu_custom_call.1
$region0: #{tpu_custom_call.1}
  #allocation0 [shape = 'u32[]', space=smem, size = 0x4, offset = 0x4, fixed_abs, tag = 'smem constant byte address 0x4 - core index']
  #allocation1 [shape = 'u32[144,128]{1,0:T(1,128)}', space=vmem, size = 0x12000, scoped, tag = 'internal scratch']
  #allocation2 [shape = 'f32[1,1]{1,0:T(1,128)S(6)}', space=smem, size = 0x200, scoped, tag = 'scoped memory for tpu_custom_call.1']
  %s0 = inlined_call_operand.hbm [shape: f32[8,32], index: 0, kind: input, shape index: {}]
  %s1 = inlined_call_operand.vmem [shape: f32[1,32], index: 1, kind: input, shape index: {}]
  %s2 = inlined_call_operand.<no memory space> [shape: f32[1,1], index: 2, kind: input, shape index: {}]
  %s3 = inlined_call_operand.vmem [shape: f32[8,1], index: 3, kind: output, shape index: {}]
  %s4 = sld [smem:[#allocation0]]
  $region26: #{tpu_custom_call.1} parent=0
    _
  %s6 = ssub.s32 1, %s4
  %s7 = scalar_select 0, %s6, %s4
  %8 = sst [smem:[#allocation2]] %s2
  $region1: #{tpu_custom_call.1} parent=0
    #allocation3 [shape = 'u8[4096]{0}', space=vmem, size = 0x1000, scoped, tag = 'input window, operand 0, single buffered']
    #allocation4 [shape = 's32[1]{0}', space=sflag, size = 0x4, scoped, tag = 'scoped memory for tpu_custom_call.1']
    %9 = vsyncpa [#allocation4], 0
    // Predicated region
    $region2: #{tpu_custom_call.1} parent=1 // pred_check
      _
    $region3: #{tpu_custom_call.1} parent=1 // pred_check_branch
      %11 = sbr.rel (0) target = $region5
    $region4: #{tpu_custom_call.1} parent=1 // pred_region
      %s13 = ssub.s32 128, 128
      %14 = vsyncadd [#allocation4], %s13
      %s16 = sshll.u32 [#allocation3], 4
      %s17 = int_to_ptr.vmem [resolvable:$true] %s16
      %19 = dma.hbm_to_vmem [thread:$0]  %s0, 128, %s17, [#allocation4]
    $region5: #{tpu_custom_call.1} parent=1 // pred_fallthru
      _
    // Predicated region
    $region6: #{tpu_custom_call.1} parent=1 // pred_check
      _
    $region7: #{tpu_custom_call.1} parent=1 // pred_check_branch
      %21 = sbr.rel (0) target = $region9
    $region8: #{tpu_custom_call.1} parent=1 // pred_region
      _
    $region9: #{tpu_custom_call.1} parent=1 // pred_fallthru
      _
    // Predicated region
    $region10: #{tpu_custom_call.1} parent=1 // pred_check
      _
    $region11: #{tpu_custom_call.1} parent=1 // pred_check_branch
      %23 = sbr.rel (0) target = $region13
    $region12: #{tpu_custom_call.1} parent=1 // pred_region
      _
    $region13: #{tpu_custom_call.1} parent=1 // pred_fallthru
      _
    // Predicated region
    $region14: #{tpu_custom_call.1} parent=1 // pred_check
      _
    $region15: #{tpu_custom_call.1} parent=1 // pred_check_branch
      %25 = sbr.rel (0) target = $region17
    $region16: #{tpu_custom_call.1} parent=1 // pred_region
      %26 = dma.done [#allocation4], 128
    $region17: #{tpu_custom_call.1} parent=1 // pred_fallthru
      _
    %v27 = vld [vmem:[#allocation3] sm:$0xff]
    %v28 = vld [vmem:[%s1] sm:$0x1]
    %v30 = vlaneseq
    %v31 = vshrl.u32 %v30, 7
    %v32 = vsub.s32 0, %v31
    %v33 = vrot.slane %v28, %v32
    %v35 = vmul.f32 %v27, %v33
    %vm36 = vcmask 261120
    %v37 = vsel %vm36, %v35, 0.0
    %38 = vadd.xlane.f32.xlu0 %v37
    %v39 = vpop.xlane.xlu0 %38
    %s40 = sld [smem:[#allocation2]]
    %v41 = vstv %s40
    %v42 = vadd.f32 %v39, %v41
    %v43 = vxor.u32 %v42, 2147483648
    %v44 = vmul.f32 %v43, 1.442695
    %v45 = vpow.pop %v44
    %v46 = vadd.f32 %v45, 1.0
    %v47 = vrcp.pop %v46
    %v48 = vmul.f32 1.0, %v47
    %vm49 = vcmask 7168
    %50 = vst.msk [vmem:[%s3] sm:$0xff] %vm49, %v48
    // Predicated region
    $region18: #{tpu_custom_call.1} parent=1 // pred_check
      _
    $region19: #{tpu_custom_call.1} parent=1 // pred_check_branch
      %52 = sbr.rel (0) target = $region21
    $region20: #{tpu_custom_call.1} parent=1 // pred_region
      _
    $region21: #{tpu_custom_call.1} parent=1 // pred_fallthru
      _
    // Predicated region
    $region22: #{tpu_custom_call.1} parent=1 // pred_check
      _
    $region23: #{tpu_custom_call.1} parent=1 // pred_check_branch
      %54 = sbr.rel (0) target = $region25
    $region24: #{tpu_custom_call.1} parent=1 // pred_region
      _
    $region25: #{tpu_custom_call.1} parent=1 // pred_fallthru
      _
    %55 = vsyncpa [#allocation4], 1

</llo_original>
